<compile_context>
chip_gen: v7x
topology: tpu7x:2x2x1
jax: 0.10.0
libtpu: 0.0.40
codegen_flags: <defaults>
</compile_context>

<pallas_src>
import jax
import jax.numpy as jnp
from jax import lax
from jax.experimental import pallas as pl
from jax.experimental.pallas import tpu as pltpu


_EPS = 1e-5
_MAX_LANE_TILE = 16384          # lane-tile cap (128 vregs wide); raised from 4096
_TARGET_STEP_ELEMS = 1 << 20    # ~4 MiB f32 per input tile -> 4-8 MiB HBM/step


# ----------------------------- hardware sizing ------------------------------
def _hw_params():
    """Best-effort (physical VMEM bytes per TensorCore, TensorCores per chip)."""
    vmem = 128 * 1024 * 1024            # v5e / v6e default
    cores = 1
    try:
        info = pltpu.get_tpu_info()
        v = getattr(info, "vmem_capacity_bytes", None)
        if v:
            vmem = int(v)
    except Exception:
        pass
    try:
        kind = jax.devices()[0].device_kind.lower()
        if "v7" in kind:                # v7x: 2 TCs/chip, 64 MiB VMEM per TC
            cores = 2
            vmem = min(vmem, 64 * 1024 * 1024)
    except Exception:
        pass
    return vmem, cores


def _block_spec(shape, index_map, buffers):
    """BlockSpec with optional deeper multi-buffering (v7x); falls back to the
    default double buffer on jax versions without `pipeline_mode`."""
    if buffers > 2 and hasattr(pl, "Buffered"):
        try:
            return pl.BlockSpec(shape, index_map, pipeline_mode=pl.Buffered(buffers))
        except TypeError:
            pass
    return pl.BlockSpec(shape, index_map)


def _pick_tiles(B, C, HW, itemsize, vmem_limit, n_buf, num_tc):
    """Pick (nb, t): batch elements folded per block and token (lane) tile size.

    Per-element VMEM cost ~= n_buf copies each of the input and output tile
    plus ~3 f32 temporaries inside the kernel (upcast, centered, squared), so
    the tile is sized against that, not raw input bytes.
    """
    bytes_per_elem = 2 * n_buf * itemsize + 3 * 4
    usable = max(2 * 1024 * 1024, int(vmem_limit * 0.85))
    max_elems = max(C * 128, usable // bytes_per_elem)

    if HW > 128:
        # Tokens tiled along lanes; one image per block.
        nb = 1
        max_tok = max(128, max_elems // C)
        if HW <= max_tok and HW <= _MAX_LANE_TILE:
            t = HW                                  # full extent: always legal
        else:
            t = min(HW, _MAX_LANE_TILE, max_tok)
            t = max(128, (t // 128) * 128)          # lane-dense multiple of 128
    else:
        # Small spatial extent: fold several batch elements into one block so
        # each grid step still moves a useful number of bytes.
        t = HW
        per_image = max(C * HW, 1)
        nb = min(B,
                 max(1, max_elems // per_image),
                 max(1, _TARGET_STEP_ELEMS // per_image))

    if num_tc >= 2:
        # Megacore balance (v7x): keep the total step count a multiple of the
        # core count so neither TensorCore idles.  Skipped on 1-TC chips where
        # an extra split is pure per-step overhead.
        def steps(nb_, t_):
            return pl.cdiv(B, nb_) * pl.cdiv(HW, t_)

        if steps(nb, t) % num_tc != 0:
            fixed = False
            if t > 128:
                base = t if t % 128 == 0 else (t // 128) * 128
                start = 1 if base == t else 0
                for k in range(start, start + 8):
                    tt = base - 128 * k
                    if tt < 128:
                        break
                    if steps(nb, tt) % num_tc == 0:   # only 128-multiples tried
                        t = tt
                        fixed = True
                        break
            if not fixed and nb > 1:
                for nb_try in range(nb - 1, 0, -1):
                    if steps(nb_try, t) % num_tc == 0:
                        nb = nb_try
                        break
    return nb, t


# --------------------------------- kernels -----------------------------------
def _withbias_ln_kernel(x_ref, w_ref, b_ref, o_ref):
    # x_ref: (nb, C, T) -- channels on sublanes, tokens on lanes.
    # NOTE: on ragged (masked) tiles the padded lanes / batch rows hold
    # uninitialized data; their per-token statistics are garbage but are never
    # stored (Pallas masks the write-back).  Do not reduce across the lane or
    # batch axes here.
    x = x_ref[...].astype(jnp.float32)
    inv_c = jnp.float32(1.0 / x.shape[1])
    mu = jnp.sum(x, axis=1, keepdims=True) * inv_c              # (nb, 1, T)
    xc = x - mu
    # Two-pass variance (mean-subtracted) -- avoids E[x^2]-E[x]^2 cancellation;
    # x is already resident in VMEM so this extra pass hides under the DMA.
    var = jnp.sum(xc * xc, axis=1, keepdims=True) * inv_c
    inv = lax.rsqrt(var + _EPS)
    w = w_ref[...].astype(jnp.float32)[None]                    # (1, C, 1)
    b = b_ref[...].astype(jnp.float32)[None]
    o_ref[...] = ((xc * inv) * w + b).astype(o_ref.dtype)


def _biasfree_ln_kernel(x_ref, w_ref, o_ref):
    x = x_ref[...].astype(jnp.float32)
    inv_c = jnp.float32(1.0 / x.shape[1])
    mu = jnp.sum(x, axis=1, keepdims=True) * inv_c
    xc = x - mu
    var = jnp.sum(xc * xc, axis=1, keepdims=True) * inv_c
    inv = lax.rsqrt(var + _EPS)
    w = w_ref[...].astype(jnp.float32)[None]
    # BiasFree variant scales x (NOT x - mu), matching Restormer's
    # BiasFree_LayerNorm: x / sqrt(var + eps) * weight.
    o_ref[...] = ((x * inv) * w).astype(o_ref.dtype)


# --------------------------------- wrapper ------------------------------------
def layer_norm_nchw(x, weight, bias=None):
    """LayerNorm module forward: NCHW in, NCHW out (normalizes over C).

    Equivalent to to_4d(body(to_3d(x)), h, w) in the PyTorch module, with the
    channel-last layout change fused into the kernel (no XLA transposes).
    """
    B, C, H, W = x.shape
    HW = H * W
    x3 = x.reshape(B, C, HW)                       # contiguous reshape, free
    itemsize = jnp.dtype(x.dtype).itemsize

    phys_vmem, num_tc = _hw_params()
    # 96 MiB on 128-MiB parts (v5e/v6e), ~48 MiB on v7x's 64-MiB VMEM.
    vmem_limit = max(32 * 1024 * 1024,
                     min(phys_vmem * 3 // 4, 96 * 1024 * 1024))
    n_buf = 3 if num_tc >= 2 else 2                # deeper pipelining only on v7x

    nb, t = _pick_tiles(B, C, HW, itemsize, vmem_limit, n_buf, num_tc)
    grid = (pl.cdiv(B, nb), pl.cdiv(HW, t))        # ragged tiles masked on store

    x_spec = _block_spec((nb, C, t), lambda b, j: (b, 0, j), n_buf)
    o_spec = _block_spec((nb, C, t), lambda b, j: (b, 0, j), n_buf)
    p_spec = pl.BlockSpec((C, 1), lambda b, j: (0, 0))
    out_shape = jax.ShapeDtypeStruct((B, C, HW), x.dtype)

    cp = pltpu.CompilerParams(
        dimension_semantics=("parallel", "parallel"),
        vmem_limit_bytes=int(vmem_limit),
    )

    w2 = weight.reshape(C, 1)
    if bias is None:
        y3 = pl.pallas_call(
            _biasfree_ln_kernel,
            out_shape=out_shape,
            grid=grid,
            in_specs=[x_spec, p_spec],
            out_specs=o_spec,
            compiler_params=cp,
        )(x3, w2)
    else:
        y3 = pl.pallas_call(
            _withbias_ln_kernel,
            out_shape=out_shape,
            grid=grid,
            in_specs=[x_spec, p_spec, p_spec],
            out_specs=o_spec,
            compiler_params=cp,
        )(x3, w2, bias.reshape(C, 1))
    return y3.reshape(B, C, H, W)


# ---------------------------- pure-JAX references ----------------------------
def _ref_withbias(x, w, b):
    xf = x.astype(jnp.float32)
    mu = jnp.mean(xf, axis=1, keepdims=True)
    var = jnp.mean((xf - mu) ** 2, axis=1, keepdims=True)
    y = (xf - mu) / jnp.sqrt(var + _EPS) * w.reshape(1, -1, 1, 1) \
        + b.reshape(1, -1, 1, 1)
    return y.astype(x.dtype)


def _ref_biasfree(x, w):
    xf = x.astype(jnp.float32)
    mu = jnp.mean(xf, axis=1, keepdims=True)
    var = jnp.mean((xf - mu) ** 2, axis=1, keepdims=True)
    y = xf / jnp.sqrt(var + _EPS) * w.reshape(1, -1, 1, 1)
    return y.astype(x.dtype)


if __name__ == "__main__":
    key = jax.random.PRNGKey(0)
    k1, k2, k3, k4, k5 = jax.random.split(key, 5)

    # Primary shape matching the PyTorch module usage (NCHW).
    B, C, H, W = 2, 4, 16, 16
    x = jax.random.normal(k1, (B, C, H, W), dtype=jnp.float32)
    weight = 1.0 + 0.1 * jax.random.normal(k2, (C,), dtype=jnp.float32)
    bias = 0.1 * jax.random.normal(k3, (C,), dtype=jnp.float32)

    # WithBias variant (default when LayerNorm_type != 'BiasFree').
    y_wb = jax.block_until_ready(layer_norm_nchw(x, weight, bias))
    assert y_wb.shape == (B, C, H, W)
    assert jnp.allclose(y_wb, _ref_withbias(x, weight, bias), atol=1e-4, rtol=1e-4)

    # BiasFree variant.
    y_bf = jax.block_until_ready(layer_norm_nchw(x, weight, None))
    assert y_bf.shape == (B, C, H, W)
    assert jnp.allclose(y_bf, _ref_biasfree(x, weight), atol=1e-4, rtol=1e-4)

    # Ragged token tile: H*W not a multiple of 128.
    B2, C2, H2, W2 = 1, 48, 10, 20
    x2 = jax.random.normal(k4, (B2, C2, H2, W2), dtype=jnp.float32)
    w2 = 1.0 + 0.05 * jax.random.normal(k2, (C2,), dtype=jnp.float32)
    b2 = 0.05 * jax.random.normal(k3, (C2,), dtype=jnp.float32)
    y2 = jax.block_until_ready(layer_norm_nchw(x2, w2, b2))
    assert jnp.allclose(y2, _ref_withbias(x2, w2, b2), atol=1e-4, rtol=1e-4)

    # Small spatial extent -> batch-folded blocks (nb > 1); also bf16 input.
    B3, C3, H3, W3 = 8, 16, 8, 8
    x3 = jax.random.normal(k5, (B3, C3, H3, W3), dtype=jnp.float32)
    w3 = 1.0 + 0.05 * jax.random.normal(k2, (C3,), dtype=jnp.float32)
    b3 = 0.05 * jax.random.normal(k3, (C3,), dtype=jnp.float32)
    y3 = jax.block_until_ready(layer_norm_nchw(x3, w3, b3))
    assert jnp.allclose(y3, _ref_withbias(x3, w3, b3), atol=1e-4, rtol=1e-4)

    x3b = x3.astype(jnp.bfloat16)
    y3b = jax.block_until_ready(layer_norm_nchw(x3b, w3, b3))
    assert jnp.allclose(y3b.astype(jnp.float32),
                        _ref_withbias(x3b, w3, b3).astype(jnp.float32),
                        atol=5e-2, rtol=5e-2)

    print("KERNEL_OK")
</pallas_src>

<mosaic_0001>
module attributes {stable_mosaic.version = 11 : i64} {
  func.func @_withbias_ln_kernel(%arg0: i32, %arg1: i32, %arg2: memref<1x4x256xf32, #tpu.memory_space<vmem>>, %arg3: memref<4x1xf32, #tpu.memory_space<vmem>>, %arg4: memref<4x1xf32, #tpu.memory_space<vmem>>, %arg5: memref<1x4x256xf32, #tpu.memory_space<vmem>>) attributes {dimension_semantics = [#tpu.dimension_semantics<parallel>, #tpu.dimension_semantics<parallel>], iteration_bounds = array<i64: 2, 1>, scalar_prefetch = 0 : i64, scratch_operands = 0 : i64, tpu.core_type = #tpu.core_type<tc>, window_params = [{transform_indices = @transform_0, window_bounds = array<i64: 1, 4, 256>}, {pipeline_mode = #tpu.pipeline_mode<synchronous>, transform_indices = @transform_1, window_bounds = array<i64: 4, 1>}, {pipeline_mode = #tpu.pipeline_mode<synchronous>, transform_indices = @transform_2, window_bounds = array<i64: 4, 1>}, {transform_indices = @transform_3, window_bounds = array<i64: 1, 4, 256>}]} {
    %c0 = arith.constant 0 : index
    %c0_0 = arith.constant 0 : index
    %c0_1 = arith.constant 0 : index
    %0 = vector.load %arg2[%c0, %c0_0, %c0_1] : memref<1x4x256xf32, #tpu.memory_space<vmem>>, vector<1x4x256xf32>
    %cst = arith.constant dense<0.000000e+00> : vector<1x256xf32>
    %1 = vector.multi_reduction <add>, %0, %cst [1] : vector<1x4x256xf32> to vector<1x256xf32>
    %2 = vector.shape_cast %1 : vector<1x256xf32> to vector<1x1x256xf32>
    %cst_2 = arith.constant 2.500000e-01 : f32
    %3 = vector.broadcast %cst_2 : f32 to vector<1x1x256xf32>
    %4 = arith.mulf %2, %3 : vector<1x1x256xf32>
    %5 = vector.broadcast %4 : vector<1x1x256xf32> to vector<1x4x256xf32>
    %6 = arith.subf %0, %5 : vector<1x4x256xf32>
    %7 = arith.mulf %6, %6 : vector<1x4x256xf32>
    %cst_3 = arith.constant dense<0.000000e+00> : vector<1x256xf32>
    %8 = vector.multi_reduction <add>, %7, %cst_3 [1] : vector<1x4x256xf32> to vector<1x256xf32>
    %9 = vector.shape_cast %8 : vector<1x256xf32> to vector<1x1x256xf32>
    %cst_4 = arith.constant 2.500000e-01 : f32
    %10 = vector.broadcast %cst_4 : f32 to vector<1x1x256xf32>
    %11 = arith.mulf %9, %10 : vector<1x1x256xf32>
    %cst_5 = arith.constant 9.99999974E-6 : f32
    %12 = vector.broadcast %cst_5 : f32 to vector<1x1x256xf32>
    %13 = arith.addf %11, %12 : vector<1x1x256xf32>
    %14 = math.rsqrt %13 : vector<1x1x256xf32>
    %c0_6 = arith.constant 0 : index
    %c0_7 = arith.constant 0 : index
    %15 = vector.load %arg3[%c0_6, %c0_7] : memref<4x1xf32, #tpu.memory_space<vmem>>, vector<4x1xf32>
    %16 = vector.shape_cast %15 : vector<4x1xf32> to vector<1x4x1xf32>
    %c0_8 = arith.constant 0 : index
    %c0_9 = arith.constant 0 : index
    %17 = vector.load %arg4[%c0_8, %c0_9] : memref<4x1xf32, #tpu.memory_space<vmem>>, vector<4x1xf32>
    %18 = vector.shape_cast %17 : vector<4x1xf32> to vector<1x4x1xf32>
    %19 = vector.broadcast %14 : vector<1x1x256xf32> to vector<1x4x256xf32>
    %20 = arith.mulf %6, %19 : vector<1x4x256xf32>
    %21 = vector.broadcast %16 : vector<1x4x1xf32> to vector<1x4x256xf32>
    %22 = arith.mulf %20, %21 : vector<1x4x256xf32>
    %23 = vector.broadcast %18 : vector<1x4x1xf32> to vector<1x4x256xf32>
    %24 = arith.addf %22, %23 : vector<1x4x256xf32>
    %c0_10 = arith.constant 0 : index
    %c0_11 = arith.constant 0 : index
    %c0_12 = arith.constant 0 : index
    %25 = vector.load %arg5[%c0_10, %c0_11, %c0_12] : memref<1x4x256xf32, #tpu.memory_space<vmem>>, vector<1x4x256xf32>
    tpu.vector_store %arg5[%c0_10, %c0_11, %c0_12], %24 {strides = array<i32>} : memref<1x4x256xf32, #tpu.memory_space<vmem>>, vector<1x4x256xf32>,
    return
  }
  func.func @transform_0(%arg0: i32, %arg1: i32) -> (i32, i32, i32) {
    %c0_i32 = arith.constant 0 : i32
    %c0_i32_0 = arith.constant 0 : i32
    return %arg0, %c0_i32, %arg1 : i32, i32, i32
  }
  func.func @transform_1(%arg0: i32, %arg1: i32) -> (i32, i32) {
    %c0_i32 = arith.constant 0 : i32
    %c0_i32_0 = arith.constant 0 : i32
    %c0_i32_1 = arith.constant 0 : i32
    return %c0_i32, %c0_i32_0 : i32, i32
  }
  func.func @transform_2(%arg0: i32, %arg1: i32) -> (i32, i32) {
    %c0_i32 = arith.constant 0 : i32
    %c0_i32_0 = arith.constant 0 : i32
    %c0_i32_1 = arith.constant 0 : i32
    return %c0_i32, %c0_i32_0 : i32, i32
  }
  func.func @transform_3(%arg0: i32, %arg1: i32) -> (i32, i32, i32) {
    %c0_i32 = arith.constant 0 : i32
    %c0_i32_0 = arith.constant 0 : i32
    return %arg0, %c0_i32, %arg1 : i32, i32, i32
  }
}

</mosaic_0001>

<llo_original>
// kernel: tpu_custom_call.1
$region0: #{tpu_custom_call.1}
  #allocation0 [shape = 'u32[]', space=smem, size = 0x4, offset = 0x4, fixed_abs, tag = 'smem constant byte address 0x4 - core index']
  #allocation1 [shape = 'u32[144,128]{1,0:T(1,128)}', space=vmem, size = 0x12000, scoped, tag = 'internal scratch']
  %s0 = inlined_call_operand.hbm [shape: f32[2,4,256], index: 0, kind: input, shape index: {}]
  %s1 = inlined_call_operand.hbm [shape: f32[4,1], index: 1, kind: input, shape index: {}]
  %s2 = inlined_call_operand.hbm [shape: f32[4,1], index: 2, kind: input, shape index: {}]
  %s3 = inlined_call_operand.hbm [shape: f32[2,4,256], index: 3, kind: output, shape index: {}]
  %s4 = sld [smem:[#allocation0]]
  $region57: #{tpu_custom_call.1} parent=0
    _
  %s6 = ssub.s32 1, %s4
  %s7 = scalar_select 0, %s6, %s4
  $region1: #{tpu_custom_call.1} parent=0
    #allocation2 [shape = 'u8[8192]{0}', space=vmem, size = 0x2000, scoped, tag = 'input window, operand 0']
    #allocation3 [shape = 's32[2]{0}', space=sflag, size = 0x8, scoped, tag = 'scoped memory for tpu_custom_call.1']
    #allocation4 [shape = 's32[2]{0}', space=sflag, size = 0x8, scoped, tag = 'scoped memory for tpu_custom_call.1']
    #allocation5 [shape = 'u8[2048]{0}', space=vmem, size = 0x800, scoped, tag = 'input window, operand 1, single buffered']
    #allocation6 [shape = 's32[1]{0}', space=sflag, size = 0x4, scoped, tag = 'scoped memory for tpu_custom_call.1']
    #allocation7 [shape = 'u8[2048]{0}', space=vmem, size = 0x800, scoped, tag = 'input window, operand 2, single buffered']
    #allocation8 [shape = 'u8[8192]{0}', space=vmem, size = 0x2000, scoped, tag = 'output window, operand 0']
    %8 = vsyncpa [#allocation3], 0
    %s9 = scalar_lea.sflag [#allocation3], 1
    %10 = vsyncpa %s9, 0
    %11 = vsyncpa [#allocation6], 0
    %12 = vsyncpa [#allocation4], 0
    %s13 = scalar_lea.sflag [#allocation4], 1
    %14 = vsyncpa %s13, 0
    loop: start=0, step=1, limit=4
    $region2: #{tpu_custom_call.1} parent=1 // loop_pre_header
      _
    $region3: #{tpu_custom_call.1} parent=1 // loop_header
      %s16 = sphi 0, %s20
      %p17 = scmp.ge.s32.totalorder %s16, 4
      %s23 = sphi 0, %s35
      %s24 = sphi 0, %s31
      %s25 = sphi 0, %s23
      %s26 = sphi 0, %s24
      %s27 = sphi 0, %s25
      %s28 = sphi 0, %s26
      %s40 = sphi 0, %s42
      %s43 = sphi 0, %s40
      %s44 = sphi 0, %s43
      %s60 = sphi 0, %s44
      %s64 = sphi 0, %s64
      %s66 = sphi 0, %s64
      %s67 = sphi 0, %s66
      %s81 = sphi 0, %s67
      %s85 = sphi 0, %s85
      %s87 = sphi 0, %s85
      %s88 = sphi 0, %s87
      %s102 = sphi 0, %s88
      %s110 = sphi 0, %s112
      %s113 = sphi 0, %s110
      %s114 = sphi 0, %s113
      %s130 = sphi 0, %s114
    $region4: #{tpu_custom_call.1} parent=1 // loop_header_branch
      %19 = sbr.rel (%p17) target = $region8
    $region5: #{tpu_custom_call.1} parent=1 // loop_body
      %s21 = ssub.s32 %s16, 1
      %s22 = ssub.s32 %s16, 2
      %s29 = sadd.s32 1, %s24
      %p30 = scmp.ge.s32.totalorder %s29, 1
      %s31 = scalar_select %p30, 0, %s29
      %s32 = sadd.s32 1, %s23
      %s33 = scalar_select %p30, %s32, %s23
      %p34 = scmp.ge.s32.totalorder %s33, 2
      %s35 = scalar_select %p34, 0, %s33
      %s36 = ssub.s32 %s23, %s35
      %s37 = ssub.s32 %s24, %s31
      %s38 = sor.u32 %s36, %s37
      %p39 = scmp.eq.s32.totalorder %s38, 0
      %s41 = sadd.s32 %s40, 1
      %s42 = scalar_select %p39, %s40, %s41
      %p45 = pneg %p39
      %p46 = scmp.eq.s32.totalorder %s16, 1
      %p47 = por %p45, %p46
      %p48 = scmp.ne.s32.totalorder %s40, %s43
      %p49 = scmp.eq.s32.totalorder %s16, 0
      %p50 = por %p48, %p49
      %p51 = scmp.ne.s32.totalorder %s40, %s43
      %p52 = scmp.eq.s32.totalorder %s21, 1
      %p53 = por %p51, %p52
      %p54 = scmp.ne.s32.totalorder %s43, %s44
      %p55 = scmp.eq.s32.totalorder %s21, 0
      %p56 = por %p54, %p55
      %p57 = scmp.ne.s32.totalorder %s43, %s44
      %p58 = scmp.eq.s32.totalorder %s22, 1
      %p59 = por %p57, %p58
      %p61 = scmp.ne.s32.totalorder %s44, %s60
      %p62 = scmp.eq.s32.totalorder %s22, 0
      %p63 = por %p61, %p62
      %s65 = sadd.s32 %s64, 1
      %p68 = scmp.eq.s32.totalorder %s16, 1
      %p69 = scmp.ne.s32.totalorder %s64, %s66
      %p70 = scmp.eq.s32.totalorder %s16, 0
      %p71 = por %p69, %p70
      %p72 = scmp.ne.s32.totalorder %s64, %s66
      %p73 = scmp.eq.s32.totalorder %s21, 1
      %p74 = por %p72, %p73
      %p75 = scmp.ne.s32.totalorder %s66, %s67
      %p76 = scmp.eq.s32.totalorder %s21, 0
      %p77 = por %p75, %p76
      %p78 = scmp.ne.s32.totalorder %s66, %s67
      %p79 = scmp.eq.s32.totalorder %s22, 1
      %p80 = por %p78, %p79
      %p82 = scmp.ne.s32.totalorder %s67, %s81
      %p83 = scmp.eq.s32.totalorder %s22, 0
      %p84 = por %p82, %p83
      %s86 = sadd.s32 %s85, 1
      %p89 = scmp.eq.s32.totalorder %s16, 1
      %p90 = scmp.ne.s32.totalorder %s85, %s87
      %p91 = scmp.eq.s32.totalorder %s16, 0
      %p92 = por %p90, %p91
      %p93 = scmp.ne.s32.totalorder %s85, %s87
      %p94 = scmp.eq.s32.totalorder %s21, 1
      %p95 = por %p93, %p94
      %p96 = scmp.ne.s32.totalorder %s87, %s88
      %p97 = scmp.eq.s32.totalorder %s21, 0
      %p98 = por %p96, %p97
      %p99 = scmp.ne.s32.totalorder %s87, %s88
      %p100 = scmp.eq.s32.totalorder %s22, 1
      %p101 = por %p99, %p100
      %p103 = scmp.ne.s32.totalorder %s88, %s102
      %p104 = scmp.eq.s32.totalorder %s22, 0
      %p105 = por %p103, %p104
      %s106 = ssub.s32 %s23, %s35
      %s107 = ssub.s32 %s24, %s31
      %s108 = sor.u32 %s106, %s107
      %p109 = scmp.eq.s32.totalorder %s108, 0
      %s111 = sadd.s32 %s110, 1
      %s112 = scalar_select %p109, %s110, %s111
      %p115 = pneg %p109
      %p116 = scmp.eq.s32.totalorder %s16, 1
      %p117 = por %p115, %p116
      %p118 = scmp.ne.s32.totalorder %s110, %s113
      %p119 = scmp.eq.s32.totalorder %s16, 0
      %p120 = por %p118, %p119
      %p121 = scmp.ne.s32.totalorder %s110, %s113
      %p122 = scmp.eq.s32.totalorder %s21, 1
      %p123 = por %p121, %p122
      %p124 = scmp.ne.s32.totalorder %s113, %s114
      %p125 = scmp.eq.s32.totalorder %s21, 0
      %p126 = por %p124, %p125
      %p127 = scmp.ne.s32.totalorder %s113, %s114
      %p128 = scmp.eq.s32.totalorder %s22, 1
      %p129 = por %p127, %p128
      %p131 = scmp.ne.s32.totalorder %s114, %s130
      %p132 = scmp.eq.s32.totalorder %s22, 0
      %p133 = por %p131, %p132
      %p134 = scmp.le.s32.totalorder 1, %s16
      %p135 = scmp.lt.s32.totalorder %s16, 3
      %p136 = pnand %p134, %p135
      %p137 = pneg %p136
      // Predicated region
      $region9: #{tpu_custom_call.1} parent=5 // pred_check
        _
      $region10: #{tpu_custom_call.1} parent=5 // pred_check_branch
        %139 = sbr.rel (%p136) target = $region12
      $region11: #{tpu_custom_call.1} parent=5 // pred_region
        %s140 = ssub.s32 %s16, 1
        // Predicated region
        $region13: #{tpu_custom_call.1} parent=11 // pred_check
          %p141 = pneg %p77
        $region14: #{tpu_custom_call.1} parent=11 // pred_check_branch
          %143 = sbr.rel (%p141) target = $region16
        $region15: #{tpu_custom_call.1} parent=11 // pred_region
          %s145 = ssub.s32 64, 64
          %146 = vsyncadd [#allocation6], %s145
          %s148 = sshll.u32 [#allocation5], 4
          %s149 = int_to_ptr.vmem [resolvable:$true] %s148
          %151 = dma.hbm_to_vmem [thread:$0]  %s1, 64, %s149, [#allocation6]
        $region16: #{tpu_custom_call.1} parent=11 // pred_fallthru
          _
        // Predicated region
        $region17: #{tpu_custom_call.1} parent=11 // pred_check
          %p152 = pneg %p98
        $region18: #{tpu_custom_call.1} parent=11 // pred_check_branch
          %154 = sbr.rel (%p152) target = $region20
        $region19: #{tpu_custom_call.1} parent=11 // pred_region
          %s156 = ssub.s32 64, 64
          %157 = vsyncadd [#allocation6], %s156
          %s159 = sshll.u32 [#allocation7], 4
          %s160 = int_to_ptr.vmem [resolvable:$true] %s159
          %162 = dma.hbm_to_vmem [thread:$0]  %s2, 64, %s160, [#allocation6]
        $region20: #{tpu_custom_call.1} parent=11 // pred_fallthru
          _
      $region12: #{tpu_custom_call.1} parent=5 // pred_fallthru
        _
      %p163 = scmp.lt.s32.totalorder %s16, 2
      // Predicated region
      $region21: #{tpu_custom_call.1} parent=5 // pred_check
        %p164 = pneg %p163
      $region22: #{tpu_custom_call.1} parent=5 // pred_check_branch
        %166 = sbr.rel (%p164) target = $region24
      $region23: #{tpu_custom_call.1} parent=5 // pred_region
        // Predicated region
        $region25: #{tpu_custom_call.1} parent=23 // pred_check
          %p167 = pneg %p50
        $region26: #{tpu_custom_call.1} parent=23 // pred_check_branch
          %169 = sbr.rel (%p167) target = $region28
        $region27: #{tpu_custom_call.1} parent=23 // pred_region
          %s170 = sand.u32 %s40, 1
          %s171 = scalar_lea.sflag [#allocation3], %s170
          %s172 = sand.u32 %s40, 1
          %s173 = smul.addr %s172, 8
          %s174 = scalar_lea.vmem [#allocation2], %s173
          %s175 = smul.u32 2, %s24
          %s177 = ssub.s32 128, 128
          %178 = vsyncadd %s171, %s177
          %s179 = smul.addr %s23, 2
          %s180 = sadd.s32 %s175, %s179
          %s181 = smul.addr %s180, 64
          %s182 = scalar_lea.hbm %s0, %s181
          %s184 = sshll.u32 %s174, 4
          %s185 = int_to_ptr.vmem [resolvable:$true] %s184
          %187 = dma.hbm_to_vmem [thread:$0]  %s182, 128, %s185, %s171
        $region28: #{tpu_custom_call.1} parent=23 // pred_fallthru
          _
      $region24: #{tpu_custom_call.1} parent=5 // pred_fallthru
        _
      %p188 = scmp.le.s32.totalorder 1, %s16
      %p189 = scmp.lt.s32.totalorder %s16, 3
      %p190 = pnand %p188, %p189
      %p191 = pneg %p190
      // Predicated region
      $region29: #{tpu_custom_call.1} parent=5 // pred_check
        _
      $region30: #{tpu_custom_call.1} parent=5 // pred_check_branch
        %193 = sbr.rel (%p190) target = $region32
      $region31: #{tpu_custom_call.1} parent=5 // pred_region
        %s194 = ssub.s32 %s16, 1
        %s195 = sand.u32 %s43, 1
        %s196 = scalar_lea.sflag [#allocation3], %s195
        %s197 = sand.u32 %s43, 1
        %s198 = smul.addr %s197, 8
        %s199 = scalar_lea.vmem [#allocation2], %s198
        // Predicated region
        $region33: #{tpu_custom_call.1} parent=31 // pred_check
          %p200 = pneg %p56
        $region34: #{tpu_custom_call.1} parent=31 // pred_check_branch
          %202 = sbr.rel (%p200) target = $region36
        $region35: #{tpu_custom_call.1} parent=31 // pred_region
          %203 = dma.done %s196, 128
        $region36: #{tpu_custom_call.1} parent=31 // pred_fallthru
          _
        // Predicated region
        $region37: #{tpu_custom_call.1} parent=31 // pred_check
          %p204 = pneg %p77
        $region38: #{tpu_custom_call.1} parent=31 // pred_check_branch
          %206 = sbr.rel (%p204) target = $region40
        $region39: #{tpu_custom_call.1} parent=31 // pred_region
          %207 = dma.done [#allocation6], 64
        $region40: #{tpu_custom_call.1} parent=31 // pred_fallthru
          _
        // Predicated region
        $region41: #{tpu_custom_call.1} parent=31 // pred_check
          %p208 = pneg %p98
        $region42: #{tpu_custom_call.1} parent=31 // pred_check_branch
          %210 = sbr.rel (%p208) target = $region44
        $region43: #{tpu_custom_call.1} parent=31 // pred_region
          %211 = dma.done [#allocation6], 64
        $region44: #{tpu_custom_call.1} parent=31 // pred_fallthru
          _
        %s212 = sand.u32 %s43, 1
        %s213 = scalar_lea.sflag [#allocation3], %s212
        %s214 = sand.u32 %s43, 1
        %s215 = smul.addr %s214, 8
        %s216 = scalar_lea.vmem [#allocation2], %s215
        %p217 = pneg %p56
        %p218 = pneg %p53
        %p219 = pneg %p77
        %p220 = pneg %p74
        %p221 = pneg %p98
        %p222 = pneg %p95
        %p223 = pneg %p126
        %p224 = pneg %p123
        %s225 = sand.u32 %s113, 1
        %s226 = scalar_lea.sflag [#allocation4], %s225
        %s227 = sand.u32 %s113, 1
        %s228 = smul.addr %s227, 8
        %s229 = scalar_lea.vmem [#allocation8], %s228
        %s230 = smul.u32 2, %s26
        %s231 = smul.u32 2, %s26
        %v232 = vld [vmem:[%s199] sm:$0xff]
        %v234 = vcombine.high %v232, %v232
        %vm236 = vcmask 1043456
        %v237 = vsel %vm236, %v232, 0.0
        %v238 = vrot.slane %v237, 4
        %v239 = vadd.f32 %v237, %v238
        %v240 = vrot.slane %v239, 2
        %v241 = vadd.f32 %v239, %v240
        %v242 = vrot.slane %v241, 1
        %v243 = vadd.f32 %v241, %v242
        %v244 = vsel %vm236, %v234, 0.0
        %v245 = vrot.slane %v244, 4
        %v246 = vadd.f32 %v244, %v245
        %v247 = vrot.slane %v246, 2
        %v248 = vadd.f32 %v246, %v247
        %v249 = vrot.slane %v248, 1
        %v250 = vadd.f32 %v248, %v249
        %v251 = vmul.f32 %v243, 0.25
        %v252 = vmul.f32 %v250, 0.25
        %v255 = vcombine.low %v251, %v252
        %v257 = vsub.f32 %v232, %v255
        %v258 = vmul.f32 %v257, %v257
        %v260 = vcombine.high %v258, %v258
        %v262 = vsel %vm236, %v258, 0.0
        %v263 = vrot.slane %v262, 4
        %v264 = vadd.f32 %v262, %v263
        %v265 = vrot.slane %v264, 2
        %v266 = vadd.f32 %v264, %v265
        %v267 = vrot.slane %v266, 1
        %v268 = vadd.f32 %v266, %v267
        %v269 = vsel %vm236, %v260, 0.0
        %v270 = vrot.slane %v269, 4
        %v271 = vadd.f32 %v269, %v270
        %v272 = vrot.slane %v271, 2
        %v273 = vadd.f32 %v271, %v272
        %v274 = vrot.slane %v273, 1
        %v275 = vadd.f32 %v273, %v274
        %v276 = vmul.f32 %v268, 0.25
        %v277 = vmul.f32 %v275, 0.25
        %v278 = vadd.f32 %v276, 1e-05
        %v279 = vadd.f32 %v277, 1e-05
        %v280 = vrsqrt.pop %v278
        %v281 = vrsqrt.pop %v279
        %v282 = vld [vmem:[#allocation5] sm:$0xf]
        %v283 = vld [vmem:[#allocation7] sm:$0xf]
        %v286 = vcombine.low %v280, %v281
        %v288 = vmul.f32 %v257, %v286
        %290 = vset.pattern.permute.xlu0 0
        %291 = vperm.xlu0 %290, %v282
        %v292 = vpop.permute.xlu0 %291
        %v294 = vunpack.c.l.s4 839922192
        %v295 = vunpack.c.0.s8 %v294
        %v296 = vlaneseq
        %v297 = vshrl.u32 %v296, 7
        %v298 = vsub.s32 %v295, %v297
        %v299 = vrot.slane %v292, %v298
        %v301 = vmul.f32 %v288, %v299
        %303 = vset.pattern.permute.xlu0 0
        %304 = vperm.xlu0 %303, %v283
        %v305 = vpop.permute.xlu0 %304
        %v307 = vunpack.c.l.s4 839922192
        %v308 = vunpack.c.0.s8 %v307
        %v309 = vlaneseq
        %v310 = vshrl.u32 %v309, 7
        %v311 = vsub.s32 %v308, %v310
        %v312 = vrot.slane %v305, %v311
        %v314 = vadd.f32 %v301, %v312
        %315 = vst [vmem:[%s229] sm:$0xff] %v314
        %s316 = sand.u32 %s113, 1
        %s317 = scalar_lea.sflag [#allocation4], %s316
        %s318 = sand.u32 %s113, 1
        %s319 = smul.addr %s318, 8
        %s320 = scalar_lea.vmem [#allocation8], %s319
        // Predicated region
        $region45: #{tpu_custom_call.1} parent=31 // pred_check
          %p321 = pneg %p123
        $region46: #{tpu_custom_call.1} parent=31 // pred_check_branch
          %323 = sbr.rel (%p321) target = $region48
        $region47: #{tpu_custom_call.1} parent=31 // pred_region
          %s324 = smul.u32 2, %s26
          %s326 = ssub.s32 128, 128
          %327 = vsyncadd %s317, %s326
          %s328 = smul.addr %s25, 2
          %s329 = sadd.s32 %s324, %s328
          %s330 = smul.addr %s329, 64
          %s331 = scalar_lea.hbm %s3, %s330
          %s333 = sshll.u32 %s320, 4
          %s334 = int_to_ptr.vmem [resolvable:$true] %s333
          %336 = dma.vmem_to_hbm [thread:$0]  %s334, 128, %s331, %s317
        $region48: #{tpu_custom_call.1} parent=31 // pred_fallthru
          _
      $region32: #{tpu_custom_call.1} parent=5 // pred_fallthru
        _
      %p337 = scmp.le.s32.totalorder 2, %s16
      // Predicated region
      $region49: #{tpu_custom_call.1} parent=5 // pred_check
        %p338 = pneg %p337
      $region50: #{tpu_custom_call.1} parent=5 // pred_check_branch
        %340 = sbr.rel (%p338) target = $region52
      $region51: #{tpu_custom_call.1} parent=5 // pred_region
        %s341 = ssub.s32 %s16, 2
        // Predicated region
        $region53: #{tpu_custom_call.1} parent=51 // pred_check
          %p342 = pneg %p129
        $region54: #{tpu_custom_call.1} parent=51 // pred_check_branch
          %344 = sbr.rel (%p342) target = $region56
        $region55: #{tpu_custom_call.1} parent=51 // pred_region
          %s345 = sand.u32 %s114, 1
          %s346 = scalar_lea.sflag [#allocation4], %s345
          %s347 = sand.u32 %s114, 1
          %s348 = smul.addr %s347, 8
          %s349 = scalar_lea.vmem [#allocation8], %s348
          %350 = dma.done %s346, 128
        $region56: #{tpu_custom_call.1} parent=51 // pred_fallthru
          _
      $region52: #{tpu_custom_call.1} parent=5 // pred_fallthru
        _
    $region6: #{tpu_custom_call.1} parent=1 // loop_footer
      %s20 = sadd.s32 1, %s16
    $region7: #{tpu_custom_call.1} parent=1 // loop_footer_branch
      %15 = sbr.rel target = $region3
    $region8: #{tpu_custom_call.1} parent=1 // loop_exit
      _
    %351 = vsyncpa [#allocation3], 1
    %s352 = scalar_lea.sflag [#allocation3], 1
    %353 = vsyncpa %s352, 1
    %354 = vsyncpa [#allocation6], 1
    %355 = vsyncpa [#allocation4], 1
    %s356 = scalar_lea.sflag [#allocation4], 1
    %357 = vsyncpa %s356, 1

</llo_original>
